<compile_context>
chip_gen: v5e
topology: v5e:2x2
jax: 0.10.0
libtpu: 0.0.40
codegen_flags: <defaults>
</compile_context>

<pallas_src>
import functools

import jax
import jax.numpy as jnp
from jax.experimental import pallas as pl
from jax.experimental.pallas import tpu as pltpu

_LANES = 128
_TB_MAX = 2048   # batch tile width (lanes); tiny blocks, fits all generations easily


def pack_sites(site1, site2):
    """Pack the two complex site tensors into one real block-diagonal weight.

    W has shape (4*chi, 4*d) float32.  With P = [p1_r; p1_i; p2_r; p2_i] of
    shape (4d, B),  Y = W @ P stacks [A_r; A_i; C_r; C_i] (chi rows each), where
        A[b,k] = sum_j site1[0,j,k] * p1[b,j]
        C[b,k] = sum_j site2[k,j,0] * p2[b,j]
    Call once at init and reuse across forward passes.
    """
    d, chi = site1.shape[1], site1.shape[2]
    s1 = jnp.transpose(site1[0])          # (chi, d):  s1[k, j] = site1[0, j, k]
    s2 = site2[:, :, 0]                   # (chi, d):  s2[k, j] = site2[k, j, 0]
    s1r = jnp.real(s1).astype(jnp.float32)
    s1i = jnp.imag(s1).astype(jnp.float32)
    s2r = jnp.real(s2).astype(jnp.float32)
    s2i = jnp.imag(s2).astype(jnp.float32)
    z = jnp.zeros((chi, d), jnp.float32)
    w = jnp.concatenate([
        jnp.concatenate([s1r, -s1i, z,    z   ], axis=1),   # A_r rows
        jnp.concatenate([s1i,  s1r, z,    z   ], axis=1),   # A_i rows
        jnp.concatenate([z,    z,   s2r, -s2i ], axis=1),   # C_r rows
        jnp.concatenate([z,    z,   s2i,  s2r ], axis=1),   # C_i rows
    ], axis=0)                                               # (4*chi, 4*d)
    return w


def _mps_kernel(w_ref, p_ref, o_ref, *, chi):
    # One packed MXU matmul: (4chi, 4d) @ (4d, TB) -> (4chi, TB), batch on lanes.
    y = jnp.dot(w_ref[...], p_ref[...], preferred_element_type=jnp.float32)
    ar = y[0 * chi:1 * chi, :]
    ai = y[1 * chi:2 * chi, :]
    cr = y[2 * chi:3 * chi, :]
    ci = y[3 * chi:4 * chi, :]
    # chi contraction = sublane reduce over chi (<=8) lane-dense rows.
    zr = jnp.sum(ar * cr - ai * ci, axis=0, keepdims=True)   # (1, TB)
    zi = jnp.sum(ar * ci + ai * cr, axis=0, keepdims=True)   # (1, TB)
    o_ref[...] = jnp.sqrt(zr * zr + zi * zi)                 # lane-dense store


def mps_forward_packed(product_state, w_packed, *, d, chi):
    """Forward pass using a pre-packed weight (see pack_sites)."""
    B = product_state.shape[0]
    p1 = product_state[:, 0, :]            # (B, d) complex
    p2 = product_state[:, 1, :]
    # Activations: (4d, B) float32 with batch mapped to lanes.
    P = jnp.concatenate([
        jnp.real(p1).T, jnp.imag(p1).T,
        jnp.real(p2).T, jnp.imag(p2).T,
    ], axis=0).astype(jnp.float32)

    # Lane-align and tile the batch dimension (zero padding is harmless: |0| = 0).
    b_pad = max(_LANES, pl.cdiv(B, _LANES) * _LANES)
    tb = min(_TB_MAX, b_pad)
    b_pad = pl.cdiv(b_pad, tb) * tb
    if b_pad != B:
        P = jnp.pad(P, ((0, 0), (0, b_pad - B)))

    out = pl.pallas_call(
        functools.partial(_mps_kernel, chi=chi),
        out_shape=jax.ShapeDtypeStruct((1, b_pad), jnp.float32),
        grid=(b_pad // tb,),
        in_specs=[
            pl.BlockSpec((4 * chi, 4 * d), lambda i: (0, 0)),   # weight: VMEM-resident
            pl.BlockSpec((4 * d, tb), lambda i: (0, i)),        # activations: pipelined over B
        ],
        out_specs=pl.BlockSpec((1, tb), lambda i: (0, i)),      # lane-dense output
        compiler_params=pltpu.CompilerParams(
            dimension_semantics=("parallel",)),                  # megacore-shardable on v7x
    )(w_packed, P)
    return out[0, :B]


def mps_forward(product_state, site1, site2):
    """Drop-in forward (packs weights inline; prefer pack_sites once at init)."""
    d, chi = site1.shape[1], site1.shape[2]
    return mps_forward_packed(product_state, pack_sites(site1, site2), d=d, chi=chi)


def mps_forward_ref(product_state, site1, site2):
    """Pure-JAX complex reference (mirrors the torch einsums exactly)."""
    p1 = product_state[:, 0, :]
    p2 = product_state[:, 1, :]
    s1p1 = jnp.einsum('ijk,bj->bik', site1, p1)     # (B, 1, chi)
    s2p2 = jnp.einsum('ijk,bj->bik', site2, p2)     # (B, chi, 1)
    res = jnp.einsum('bij,bjk->bik', s1p1, s2p2)    # (B, 1, 1)
    return jnp.abs(res).squeeze()


if __name__ == "__main__":
    B, d, chi = 8, 4, 8
    key = jax.random.PRNGKey(0)
    k1, k2, k3, k4, k5, k6 = jax.random.split(key, 6)

    scale = 1.0 / jnp.sqrt(2.0)
    site1 = (scale * jax.random.normal(k1, (1, d, chi))
             + 1j * scale * jax.random.normal(k2, (1, d, chi))).astype(jnp.complex64)
    site2 = (scale * jax.random.normal(k3, (chi, d, 1))
             + 1j * scale * jax.random.normal(k4, (chi, d, 1))).astype(jnp.complex64)
    product_state = (jax.random.normal(k5, (B, 2, d))
                     + 1j * jax.random.normal(k6, (B, 2, d))).astype(jnp.complex64)

    # Weight packing happens once (init-time), not per forward call.
    w_packed = pack_sites(site1, site2)

    out = mps_forward_packed(product_state, w_packed, d=d, chi=chi)
    out = jax.block_until_ready(out)

    ref = mps_forward_ref(product_state, site1, site2)
    assert out.shape == (B,)
    assert jnp.allclose(out, ref, rtol=1e-4, atol=1e-4), (out, ref)

    print("KERNEL_OK")
</pallas_src>

<mosaic_0001>
module attributes {stable_mosaic.version = 11 : i64} {
  func.func @_mps_kernel(%arg0: i32, %arg1: memref<32x16xf32, #tpu.memory_space<vmem>>, %arg2: memref<16x128xf32, #tpu.memory_space<vmem>>, %arg3: memref<1x128xf32, #tpu.memory_space<vmem>>) attributes {dimension_semantics = [#tpu.dimension_semantics<parallel>], iteration_bounds = array<i64: 1>, scalar_prefetch = 0 : i64, scratch_operands = 0 : i64, tpu.core_type = #tpu.core_type<tc>, window_params = [{pipeline_mode = #tpu.pipeline_mode<synchronous>, transform_indices = @transform_0, window_bounds = array<i64: 32, 16>}, {transform_indices = @transform_1, window_bounds = array<i64: 16, 128>}, {transform_indices = @transform_2, window_bounds = array<i64: 1, 128>}]} {
    %c0 = arith.constant 0 : index
    %c0_0 = arith.constant 0 : index
    %0 = vector.load %arg1[%c0, %c0_0] : memref<32x16xf32, #tpu.memory_space<vmem>>, vector<32x16xf32>
    %c0_1 = arith.constant 0 : index
    %c0_2 = arith.constant 0 : index
    %1 = vector.load %arg2[%c0_1, %c0_2] : memref<16x128xf32, #tpu.memory_space<vmem>>, vector<16x128xf32>
    %cst = arith.constant dense<0.000000e+00> : vector<32x128xf32>
    %2 = tpu.matmul %0, %1, %cst {dimension_numbers = #tpu.dot_dimension_numbers<[1], [0], [0], [1], [0, 0, 1, 1], [], []>} : vector<32x16xf32>, vector<16x128xf32>, vector<32x128xf32> -> vector<32x128xf32>
    %3 = vector.extract_strided_slice %2 {offsets = [0, 0], sizes = [8, 128], strides = [1, 1]} : vector<32x128xf32> to vector<8x128xf32>
    %4 = vector.extract_strided_slice %2 {offsets = [8, 0], sizes = [8, 128], strides = [1, 1]} : vector<32x128xf32> to vector<8x128xf32>
    %5 = vector.extract_strided_slice %2 {offsets = [16, 0], sizes = [8, 128], strides = [1, 1]} : vector<32x128xf32> to vector<8x128xf32>
    %6 = vector.extract_strided_slice %2 {offsets = [24, 0], sizes = [8, 128], strides = [1, 1]} : vector<32x128xf32> to vector<8x128xf32>
    %7 = arith.mulf %3, %5 : vector<8x128xf32>
    %8 = arith.mulf %4, %6 : vector<8x128xf32>
    %9 = arith.subf %7, %8 : vector<8x128xf32>
    %cst_3 = arith.constant dense<0.000000e+00> : vector<128xf32>
    %10 = vector.multi_reduction <add>, %9, %cst_3 [0] : vector<8x128xf32> to vector<128xf32>
    %11 = vector.shape_cast %10 : vector<128xf32> to vector<1x128xf32>
    %12 = arith.mulf %3, %6 : vector<8x128xf32>
    %13 = arith.mulf %4, %5 : vector<8x128xf32>
    %14 = arith.addf %12, %13 : vector<8x128xf32>
    %cst_4 = arith.constant dense<0.000000e+00> : vector<128xf32>
    %15 = vector.multi_reduction <add>, %14, %cst_4 [0] : vector<8x128xf32> to vector<128xf32>
    %16 = vector.shape_cast %15 : vector<128xf32> to vector<1x128xf32>
    %17 = arith.mulf %11, %11 : vector<1x128xf32>
    %18 = arith.mulf %16, %16 : vector<1x128xf32>
    %19 = arith.addf %17, %18 : vector<1x128xf32>
    %20 = math.sqrt %19 : vector<1x128xf32>
    %c0_5 = arith.constant 0 : index
    %c0_6 = arith.constant 0 : index
    %21 = vector.load %arg3[%c0_5, %c0_6] : memref<1x128xf32, #tpu.memory_space<vmem>>, vector<1x128xf32>
    tpu.vector_store %arg3[%c0_5, %c0_6], %20 {strides = array<i32>} : memref<1x128xf32, #tpu.memory_space<vmem>>, vector<1x128xf32>,
    return
  }
  func.func @transform_0(%arg0: i32) -> (i32, i32) {
    %c0_i32 = arith.constant 0 : i32
    %c0_i32_0 = arith.constant 0 : i32
    %c0_i32_1 = arith.constant 0 : i32
    return %c0_i32, %c0_i32_0 : i32, i32
  }
  func.func @transform_1(%arg0: i32) -> (i32, i32) {
    %c0_i32 = arith.constant 0 : i32
    %c0_i32_0 = arith.constant 0 : i32
    return %c0_i32, %arg0 : i32, i32
  }
  func.func @transform_2(%arg0: i32) -> (i32, i32) {
    %c0_i32 = arith.constant 0 : i32
    %c0_i32_0 = arith.constant 0 : i32
    return %c0_i32, %arg0 : i32, i32
  }
}

</mosaic_0001>

<llo_original>
// kernel: tpu_custom_call.1
$region0: #{tpu_custom_call.1}
  #allocation0 [shape = 'u32[]', space=smem, size = 0x4, offset = 0x4, fixed_abs, tag = 'smem constant byte address 0x4 - core index']
  #allocation1 [shape = 'u32[72,128]{1,0:T(1,128)}', space=vmem, size = 0x9000, scoped, tag = 'internal scratch']
  %s0 = inlined_call_operand.vmem [shape: f32[32,16], index: 0, kind: input, shape index: {}]
  %s1 = inlined_call_operand.vmem [shape: f32[16,128], index: 1, kind: input, shape index: {}]
  %s2 = inlined_call_operand.hbm [shape: f32[1,128], index: 2, kind: output, shape index: {}]
  %s3 = sld [smem:[#allocation0]]
  $region18: #{tpu_custom_call.1} parent=0
    _
  %s5 = ssub.s32 1, %s3
  %s6 = scalar_select 0, %s5, %s3
  $region1: #{tpu_custom_call.1} parent=0
    #allocation2 [shape = 'u8[512]{0}', space=vmem, size = 0x400, scoped, tag = 'output window, operand 0, single buffered']
    #allocation3 [shape = 's32[1]{0}', space=sflag, size = 0x4, scoped, tag = 'scoped memory for tpu_custom_call.1']
    %7 = vsyncpa [#allocation3], 0
    // Predicated region
    $region2: #{tpu_custom_call.1} parent=1 // pred_check
      _
    $region3: #{tpu_custom_call.1} parent=1 // pred_check_branch
      %9 = sbr.rel (0) target = $region5
    $region4: #{tpu_custom_call.1} parent=1 // pred_region
      _
    $region5: #{tpu_custom_call.1} parent=1 // pred_fallthru
      _
    // Predicated region
    $region6: #{tpu_custom_call.1} parent=1 // pred_check
      _
    $region7: #{tpu_custom_call.1} parent=1 // pred_check_branch
      %11 = sbr.rel (0) target = $region9
    $region8: #{tpu_custom_call.1} parent=1 // pred_region
      _
    $region9: #{tpu_custom_call.1} parent=1 // pred_fallthru
      _
    %v12 = vld [vmem:[%s0] sm:$0xff]
    %v13 = vld [vmem:[%s0 + $0x8] sm:$0xff]
    %v14 = vld [vmem:[%s0 + $0x10] sm:$0xff]
    %v15 = vld [vmem:[%s0 + $0x18] sm:$0xff]
    %v16 = vld [vmem:[%s1] sm:$0xff]
    %v17 = vld [vmem:[%s1 + $0x8] sm:$0xff]
    %vm18 = vcmask 130048
    %v20 = vsel %vm18, %v12, 0
    %v23 = vsel %vm18, %v13, 0
    %v26 = vsel %vm18, %v14, 0
    %v29 = vsel %vm18, %v15, 0
    %31 = vmatpush.msra.mxu0 0.0
    %32 = vmatpush.msra.mxu0 0.0
    %33 = vmatpush.msra.mxu0 0.0
    %34 = vmatpush.msra.mxu0 0.0
    %35 = vmatpush.msra.mxu0 0.0
    %36 = vmatpush.msra.mxu0 0.0
    %37 = vmatpush.msra.mxu0 0.0
    %38 = vmatpush.msra.mxu0 0.0
    %39 = vmatpush.msra.mxu0 0.0
    %40 = vmatpush.msra.mxu0 0.0
    %41 = vmatpush.msra.mxu0 0.0
    %42 = vmatpush.msra.mxu0 0.0
    %43 = vmatpush.msra.mxu0 0.0
    %44 = vmatpush.msra.mxu0 0.0
    %45 = vmatpush.msra.mxu0 %v17
    %46 = vmatpush.msra.mxu0 %v16
    %47 = vmatmul.f32.gmra.mxu0 %v20
    %v48 = vpop.f32.mrf.mxu0
    %v49 = vadd.f32 0.0, %v48
    %50 = vmatmul.f32.gmra.mxu0 %v23
    %v51 = vpop.f32.mrf.mxu0
    %v52 = vadd.f32 0.0, %v51
    %53 = vmatmul.f32.gmra.mxu0 %v26
    %v54 = vpop.f32.mrf.mxu0
    %v55 = vadd.f32 0.0, %v54
    %56 = vmatmul.f32.gmra.mxu0 %v29
    %v57 = vpop.f32.mrf.mxu0
    %v58 = vadd.f32 0.0, %v57
    %59 = vdwg.mxu0
    %v60 = vmul.f32 %v49, %v55
    %v61 = vmul.f32 %v52, %v58
    %v62 = vsub.f32 %v60, %v61
    %v63 = vrot.slane %v62, 4
    %v64 = vadd.f32 %v62, %v63
    %v65 = vrot.slane %v64, 2
    %v66 = vadd.f32 %v64, %v65
    %v67 = vrot.slane %v66, 1
    %v68 = vadd.f32 %v66, %v67
    %v69 = vmul.f32 %v49, %v58
    %v70 = vmul.f32 %v52, %v55
    %v71 = vadd.f32 %v69, %v70
    %v72 = vrot.slane %v71, 4
    %v73 = vadd.f32 %v71, %v72
    %v74 = vrot.slane %v73, 2
    %v75 = vadd.f32 %v73, %v74
    %v76 = vrot.slane %v75, 1
    %v77 = vadd.f32 %v75, %v76
    %v78 = vmul.f32 %v68, %v68
    %v79 = vmul.f32 %v77, %v77
    %v80 = vadd.f32 %v78, %v79
    %v81 = vrsqrt.pop %v80
    %v82 = vmul.f32 %v81, %v80
    %v83 = vmul.f32 %v82, %v81
    %v84 = vmul.f32 0.5, %v83
    %v85 = vsub.f32 1.5, %v84
    %v86 = vmul.f32 %v81, %v85
    %v87 = vmul.f32 %v80, %v86
    %vm88 = vcmp.eq.f32.partialorder %v80, inf
    %v89 = vsel %vm88, %v80, %v87
    %vm90 = vcmp.eq.f32.partialorder %v80, 0.0
    %v91 = vand.u32 %v80, 2147483648
    %v92 = vsel %vm90, %v91, %v89
    %93 = vst [vmem:[#allocation2] sm:$0x1] %v92
    // Predicated region
    $region10: #{tpu_custom_call.1} parent=1 // pred_check
      _
    $region11: #{tpu_custom_call.1} parent=1 // pred_check_branch
      %95 = sbr.rel (0) target = $region13
    $region12: #{tpu_custom_call.1} parent=1 // pred_region
      %97 = vsyncadd [#allocation3], 0
      %s99 = sshll.u32 [#allocation2], 4
      %s100 = int_to_ptr.vmem [resolvable:$true] %s99
      %s101 = sshll.u32 %s2, 4
      %s102 = int_to_ptr.hbm [resolvable:$true] %s101
      %104 = dma.vmem_to_hbm [thread:$0]  %s100, 16, %s102, [#allocation3]
    $region13: #{tpu_custom_call.1} parent=1 // pred_fallthru
      _
    // Predicated region
    $region14: #{tpu_custom_call.1} parent=1 // pred_check
      _
    $region15: #{tpu_custom_call.1} parent=1 // pred_check_branch
      %106 = sbr.rel (0) target = $region17
    $region16: #{tpu_custom_call.1} parent=1 // pred_region
      %108 = dma.done [#allocation3], 16
    $region17: #{tpu_custom_call.1} parent=1 // pred_fallthru
      _
    %109 = vsyncpa [#allocation3], 1

</llo_original>
